<compile_context>
chip_gen: v5e
topology: v5e:2x2
jax: 0.10.0
libtpu: 0.0.40
codegen_flags: <defaults>
</compile_context>

<pallas_src>
import functools
import math

import jax
import jax.numpy as jnp
from jax.experimental import pallas as pl
from jax.experimental.pallas import tpu as pltpu


# ---------------------------------------------------------------------------
# Kernel bodies
# ---------------------------------------------------------------------------

def _sq_diff_kernel(a_ref, b_ref, o_ref):
    # a_ref, b_ref: VMEM f32[1, D]; o_ref: SMEM f32[N] (resident), write slot n.
    d = a_ref[...] - b_ref[...]
    o_ref[pl.program_id(0)] = jnp.sum(d * d)


def _style_stat_kernel(a_ref, b_ref, o_ref, *, HW, eps):
    # a_ref, b_ref: VMEM f32[C, HW]; o_ref: SMEM f32[N] (resident).
    # Per-channel mean + unbiased std (torch .var(dim=2) default), then
    # sum_c [(dmean)^2 + (dstd)^2]  -> scalar partial for this batch element.
    a = a_ref[...]
    b = b_ref[...]
    a_mean = jnp.mean(a, axis=1, keepdims=True)
    b_mean = jnp.mean(b, axis=1, keepdims=True)
    a_var = jnp.sum((a - a_mean) ** 2, axis=1, keepdims=True) / (HW - 1)
    b_var = jnp.sum((b - b_mean) ** 2, axis=1, keepdims=True) / (HW - 1)
    a_std = jnp.sqrt(a_var + eps)
    b_std = jnp.sqrt(b_var + eps)
    dm = a_mean - b_mean
    ds = a_std - b_std
    o_ref[pl.program_id(0)] = jnp.sum(dm * dm) + jnp.sum(ds * ds)


def _sobel_kernel(x_ref, e_ref, pad_ref, *, C, H, W):
    # x_ref: VMEM f32[C, H, W]   one batch element
    # e_ref: VMEM f32[C, H, W]   sqrt(gx^2 + gy^2 + 1e-6)
    # pad_ref: VMEM scratch f32[C, H+2, W+2]  (zero padded copy, built on-chip)
    pad_ref[...] = jnp.zeros((C, H + 2, W + 2), jnp.float32)
    pad_ref[:, 1:H + 1, 1:W + 1] = x_ref[...]
    xp = pad_ref[...]

    SX = ((-1.0, 0.0, 1.0), (-2.0, 0.0, 2.0), (-1.0, 0.0, 1.0))
    SY = ((-1.0, -2.0, -1.0), (0.0, 0.0, 0.0), (1.0, 2.0, 1.0))

    ex = jnp.zeros((C, H, W), jnp.float32)
    ey = jnp.zeros((C, H, W), jnp.float32)
    for kh in range(3):
        for kw in range(3):
            wx = SX[kh][kw]
            wy = SY[kh][kw]
            if wx == 0.0 and wy == 0.0:
                continue
            tap = jax.lax.slice(xp, (0, kh, kw), (C, kh + H, kw + W))
            if wx != 0.0:
                ex = ex + wx * tap
            if wy != 0.0:
                ey = ey + wy * tap
    e_ref[...] = jnp.sqrt(ex * ex + ey * ey + 1e-6)


def _ssim_kernel(sc_ref, a_ref, b_ref, o_ref, pad_ref, *, C, H, W):
    # sc_ref: SMEM f32[4] = [amin, amax, bmin, bmax]  (global min/max of edges)
    # a_ref, b_ref: VMEM f32[C, H, W]  un-normalised Sobel edge maps
    # o_ref: SMEM f32[N]   per-batch-element sum of the SSIM map
    # pad_ref: VMEM scratch f32[C, H+2, W+2]
    amin = sc_ref[0]
    amax = sc_ref[1]
    bmin = sc_ref[2]
    bmax = sc_ref[3]
    a = (a_ref[...] - amin) / (amax - amin + 1e-6)
    b = (b_ref[...] - bmin) / (bmax - bmin + 1e-6)

    def box_mean(v):
        # 3x3 avg pool, stride 1, zero pad, count_include_pad=True  (=> /9).
        pad_ref[...] = jnp.zeros((C, H + 2, W + 2), jnp.float32)
        pad_ref[:, 1:H + 1, 1:W + 1] = v
        vp = pad_ref[...]
        acc = jnp.zeros((C, H, W), jnp.float32)
        for kh in range(3):
            for kw in range(3):
                acc = acc + jax.lax.slice(vp, (0, kh, kw), (C, kh + H, kw + W))
        return acc * (1.0 / 9.0)

    mu_a = box_mean(a)
    mu_b = box_mean(b)
    sig_a = box_mean(a * a) - mu_a * mu_a
    sig_b = box_mean(b * b) - mu_b * mu_b
    sig_ab = box_mean(a * b) - mu_a * mu_b

    c1 = 0.01 ** 2
    c2 = 0.03 ** 2
    num = (2.0 * mu_a * mu_b + c1) * (2.0 * sig_ab + c2)
    den = (mu_a * mu_a + mu_b * mu_b + c1) * (sig_a + sig_b + c2)
    o_ref[pl.program_id(0)] = jnp.sum(num / den)


# ---------------------------------------------------------------------------
# Pallas wrappers
# ---------------------------------------------------------------------------

def _mse_pallas(a, b):
    """Mean squared error over all elements, reduced in-kernel per batch row."""
    N = a.shape[0]
    D = math.prod(a.shape[1:])
    a2 = a.reshape(N, 1, D).astype(jnp.float32)   # lane-dense last dim
    b2 = b.reshape(N, 1, D).astype(jnp.float32)
    partial = pl.pallas_call(
        _sq_diff_kernel,
        out_shape=jax.ShapeDtypeStruct((N,), jnp.float32),
        grid_spec=pltpu.PrefetchScalarGridSpec(
            num_scalar_prefetch=0,
            grid=(N,),
            in_specs=[
                pl.BlockSpec((pl.Squeezed(), 1, D), lambda n: (n, 0, 0)),
                pl.BlockSpec((pl.Squeezed(), 1, D), lambda n: (n, 0, 0)),
            ],
            out_specs=pl.BlockSpec(memory_space=pltpu.MemorySpace.SMEM),
        ),
        compiler_params=pltpu.CompilerParams(
            dimension_semantics=("arbitrary",)),
    )(a2, b2)
    return jnp.sum(partial) / (N * D)


def _style_level_pallas(g, s, eps=1e-5):
    """MSE(mean) + MSE(std) for one feature level (torch calc_mean_std)."""
    N, C = g.shape[:2]
    HW = math.prod(g.shape[2:])
    g2 = g.reshape(N, C, HW).astype(jnp.float32)
    s2 = s.reshape(N, C, HW).astype(jnp.float32)
    kernel = functools.partial(_style_stat_kernel, HW=HW, eps=eps)
    partial = pl.pallas_call(
        kernel,
        out_shape=jax.ShapeDtypeStruct((N,), jnp.float32),
        grid_spec=pltpu.PrefetchScalarGridSpec(
            num_scalar_prefetch=0,
            grid=(N,),
            in_specs=[
                pl.BlockSpec((pl.Squeezed(), C, HW), lambda n: (n, 0, 0)),
                pl.BlockSpec((pl.Squeezed(), C, HW), lambda n: (n, 0, 0)),
            ],
            out_specs=pl.BlockSpec(memory_space=pltpu.MemorySpace.SMEM),
        ),
        compiler_params=pltpu.CompilerParams(
            dimension_semantics=("arbitrary",)),
    )(g2, s2)
    return jnp.sum(partial) / (N * C)


def _sobel_edges_pallas(img):
    """Per-channel Sobel magnitude sqrt(gx^2+gy^2+1e-6), zero padded conv."""
    N, C, H, W = img.shape
    kernel = functools.partial(_sobel_kernel, C=C, H=H, W=W)
    return pl.pallas_call(
        kernel,
        out_shape=jax.ShapeDtypeStruct((N, C, H, W), jnp.float32),
        grid_spec=pltpu.PrefetchScalarGridSpec(
            num_scalar_prefetch=0,
            grid=(N,),
            in_specs=[
                pl.BlockSpec((pl.Squeezed(), C, H, W),
                             lambda n: (n, 0, 0, 0)),
            ],
            out_specs=pl.BlockSpec((pl.Squeezed(), C, H, W),
                                   lambda n: (n, 0, 0, 0)),
            scratch_shapes=[pltpu.VMEM((C, H + 2, W + 2), jnp.float32)],
        ),
        compiler_params=pltpu.CompilerParams(
            dimension_semantics=("parallel",)),
    )(img.astype(jnp.float32))


def _ssim_loss_pallas(e_gen, e_con):
    """1 - mean(SSIM map) of the min/max-normalised edge maps.

    The global min/max normalisation is folded into the SSIM kernel (passed as
    SMEM scalars) so the normalised maps never round-trip through HBM.
    """
    N, C, H, W = e_gen.shape
    scalars = jnp.stack(
        [jnp.min(e_gen), jnp.max(e_gen), jnp.min(e_con), jnp.max(e_con)]
    ).astype(jnp.float32)
    kernel = functools.partial(_ssim_kernel, C=C, H=H, W=W)
    partial = pl.pallas_call(
        kernel,
        out_shape=jax.ShapeDtypeStruct((N,), jnp.float32),
        grid_spec=pltpu.PrefetchScalarGridSpec(
            num_scalar_prefetch=0,
            grid=(N,),
            in_specs=[
                pl.BlockSpec(memory_space=pltpu.MemorySpace.SMEM),
                pl.BlockSpec((pl.Squeezed(), C, H, W),
                             lambda n: (n, 0, 0, 0)),
                pl.BlockSpec((pl.Squeezed(), C, H, W),
                             lambda n: (n, 0, 0, 0)),
            ],
            out_specs=pl.BlockSpec(memory_space=pltpu.MemorySpace.SMEM),
            scratch_shapes=[pltpu.VMEM((C, H + 2, W + 2), jnp.float32)],
        ),
        compiler_params=pltpu.CompilerParams(
            dimension_semantics=("arbitrary",)),
    )(scalars, e_gen, e_con)
    return 1.0 - jnp.sum(partial) / (N * C * H * W)


def style_transfer_loss(gen_feats, content_feats, style_feats,
                        generated_image, content,
                        lambda_c=1.0, lambda_s=10.0, lambda_ssim=1.0):
    """Forward of StyleTransferLoss.

    gen_feats are the VGG-encoder features of generated_image (precomputed —
    the encoder itself is an external pretrained network).
    Returns (total_loss, lambda_ssim * edge_loss, lambda_s * style_loss).
    """
    content_loss = _mse_pallas(gen_feats[-1], content_feats[-1])

    style_loss = jnp.float32(0.0)
    for g, s in zip(gen_feats, style_feats):
        style_loss = style_loss + _style_level_pallas(g, s)

    sobel_gen = _sobel_edges_pallas(generated_image)
    sobel_content = _sobel_edges_pallas(content)
    edge_loss = _ssim_loss_pallas(sobel_gen, sobel_content)

    total = (lambda_c * content_loss + lambda_s * style_loss
             + lambda_ssim * edge_loss)
    return total, lambda_ssim * edge_loss, lambda_s * style_loss


# ---------------------------------------------------------------------------
# Pure-JAX reference (mirrors the PyTorch module)
# ---------------------------------------------------------------------------

def _mse_ref(a, b):
    return jnp.mean((a - b) ** 2)


def _calc_mean_std_ref(feat, eps=1e-5):
    N, C = feat.shape[:2]
    f = feat.reshape(N, C, -1)
    var = jnp.var(f, axis=2, ddof=1) + eps          # torch .var() is unbiased
    return jnp.mean(f, axis=2), jnp.sqrt(var)


def _depthwise_conv_ref(x, k2d):
    C = x.shape[1]
    k = jnp.tile(k2d[None, None], (C, 1, 1, 1))
    return jax.lax.conv_general_dilated(
        x, k, window_strides=(1, 1), padding=((1, 1), (1, 1)),
        dimension_numbers=("NCHW", "OIHW", "NCHW"), feature_group_count=C)


def _sobel_ref(img):
    sx = jnp.array([[-1, 0, 1], [-2, 0, 2], [-1, 0, 1]], jnp.float32)
    sy = jnp.array([[-1, -2, -1], [0, 0, 0], [1, 2, 1]], jnp.float32)
    ex = _depthwise_conv_ref(img, sx)
    ey = _depthwise_conv_ref(img, sy)
    e = jnp.sqrt(ex ** 2 + ey ** 2 + 1e-6)
    return (e - jnp.min(e)) / (jnp.max(e) - jnp.min(e) + 1e-6)


def _ssim_loss_ref(a, b, C1=0.01 ** 2, C2=0.03 ** 2):
    box = jnp.ones((3, 3), jnp.float32) / 9.0
    avg = lambda x: _depthwise_conv_ref(x, box)
    mu_a, mu_b = avg(a), avg(b)
    sa = avg(a * a) - mu_a ** 2
    sb = avg(b * b) - mu_b ** 2
    sab = avg(a * b) - mu_a * mu_b
    m = ((2 * mu_a * mu_b + C1) * (2 * sab + C2)
         / ((mu_a ** 2 + mu_b ** 2 + C1) * (sa + sb + C2)))
    return 1.0 - jnp.mean(m)


def style_transfer_loss_ref(gen_feats, content_feats, style_feats,
                            generated_image, content,
                            lambda_c=1.0, lambda_s=10.0, lambda_ssim=1.0):
    content_loss = _mse_ref(gen_feats[-1], content_feats[-1])
    style_loss = jnp.float32(0.0)
    for g, s in zip(gen_feats, style_feats):
        gm, gs = _calc_mean_std_ref(g)
        sm, ss = _calc_mean_std_ref(s)
        style_loss = style_loss + _mse_ref(gm, sm) + _mse_ref(gs, ss)
    edge_loss = _ssim_loss_ref(_sobel_ref(generated_image), _sobel_ref(content))
    total = (lambda_c * content_loss + lambda_s * style_loss
             + lambda_ssim * edge_loss)
    return total, lambda_ssim * edge_loss, lambda_s * style_loss


# ---------------------------------------------------------------------------
# Demo / self-test
# ---------------------------------------------------------------------------

if __name__ == "__main__":
    key = jax.random.PRNGKey(0)
    keys = jax.random.split(key, 16)

    N, C, H, W = 2, 3, 16, 16
    gen_img = jax.random.uniform(keys[0], (N, C, H, W), jnp.float32)
    content_img = jax.random.uniform(keys[1], (N, C, H, W), jnp.float32)

    # TODO(synk): stand-in for vgg_encoder outputs (external pretrained net);
    # deterministic random feature maps at typical multi-scale shapes.
    feat_shapes = [(N, 8, 16, 16), (N, 16, 8, 8), (N, 32, 8, 8), (N, 32, 4, 4)]
    gen_feats, content_feats, style_feats = [], [], []
    ki = 2
    for fs in feat_shapes:
        gen_feats.append(jax.random.normal(keys[ki], fs, jnp.float32)); ki += 1
        content_feats.append(jax.random.normal(keys[ki], fs, jnp.float32)); ki += 1
        style_feats.append(jax.random.normal(keys[ki], fs, jnp.float32)); ki += 1

    total, w_edge, w_style = style_transfer_loss(
        gen_feats, content_feats, style_feats, gen_img, content_img)
    total = jax.block_until_ready(total)
    w_edge = jax.block_until_ready(w_edge)
    w_style = jax.block_until_ready(w_style)

    r_total, r_edge, r_style = style_transfer_loss_ref(
        gen_feats, content_feats, style_feats, gen_img, content_img)

    for got, ref, name in ((total, r_total, "total"),
                           (w_edge, r_edge, "edge"),
                           (w_style, r_style, "style")):
        assert jnp.allclose(got, ref, rtol=1e-4, atol=1e-4), (
            name, float(got), float(ref), float(jnp.abs(got - ref)))

    print("KERNEL_OK")
</pallas_src>

<mosaic_0001>
module attributes {stable_mosaic.version = 11 : i64} {
  func.func @_sq_diff_kernel(%arg0: i32, %arg1: memref<1x1x512xf32, #tpu.memory_space<vmem>>, %arg2: memref<1x1x512xf32, #tpu.memory_space<vmem>>, %arg3: memref<2xf32, #tpu.memory_space<smem>>) attributes {dimension_semantics = [#tpu.dimension_semantics<arbitrary>], iteration_bounds = array<i64: 2>, scalar_prefetch = 0 : i64, scratch_operands = 0 : i64, tpu.core_type = #tpu.core_type<tc>, window_params = [{transform_indices = @transform_0, window_bounds = array<i64: 1, 1, 512>}, {transform_indices = @transform_1, window_bounds = array<i64: 1, 1, 512>}, {transform_indices = @transform_2, window_bounds = array<i64: 2>}]} {
    %c0 = arith.constant 0 : index
    %c0_0 = arith.constant 0 : index
    %c0_1 = arith.constant 0 : index
    %0 = vector.load %arg1[%c0, %c0_0, %c0_1] : memref<1x1x512xf32, #tpu.memory_space<vmem>>, vector<1x1x512xf32>
    %1 = vector.shape_cast %0 : vector<1x1x512xf32> to vector<1x512xf32>
    %c0_2 = arith.constant 0 : index
    %c0_3 = arith.constant 0 : index
    %c0_4 = arith.constant 0 : index
    %2 = vector.load %arg2[%c0_2, %c0_3, %c0_4] : memref<1x1x512xf32, #tpu.memory_space<vmem>>, vector<1x1x512xf32>
    %3 = vector.shape_cast %2 : vector<1x1x512xf32> to vector<1x512xf32>
    %4 = arith.subf %1, %3 : vector<1x512xf32>
    %5 = arith.mulf %4, %4 : vector<1x512xf32>
    %6 = vector.shape_cast %5 : vector<1x512xf32> to vector<1x1x512xf32>
    %cst = arith.constant dense<0.000000e+00> : vector<1xf32>
    %7 = vector.multi_reduction <add>, %6, %cst [1, 2] : vector<1x1x512xf32> to vector<1xf32>
    %8 = vector.shape_cast %7 : vector<1xf32> to vector<1x1x1xf32>
    %9 = vector.extract %8[0, 0, 0] : f32 from vector<1x1x1xf32>
    %10 = arith.index_cast %arg0 : i32 to index
    %11 = memref.load %arg3[%10] : memref<2xf32, #tpu.memory_space<smem>>
    memref.store %9, %arg3[%10] : memref<2xf32, #tpu.memory_space<smem>>
    return
  }
  func.func @transform_0(%arg0: i32) -> (i32, i32, i32) {
    %c0_i32 = arith.constant 0 : i32
    %c0_i32_0 = arith.constant 0 : i32
    %c0_i32_1 = arith.constant 0 : i32
    return %arg0, %c0_i32, %c0_i32_0 : i32, i32, i32
  }
  func.func @transform_1(%arg0: i32) -> (i32, i32, i32) {
    %c0_i32 = arith.constant 0 : i32
    %c0_i32_0 = arith.constant 0 : i32
    %c0_i32_1 = arith.constant 0 : i32
    return %arg0, %c0_i32, %c0_i32_0 : i32, i32, i32
  }
  func.func @transform_2(%arg0: i32) -> i32 {
    %c0_i32 = arith.constant 0 : i32
    %c0_i32_0 = arith.constant 0 : i32
    return %c0_i32 : i32
  }
}

</mosaic_0001>

<llo_original>
// kernel: tpu_custom_call.1
$region0: #{tpu_custom_call.1}
  #allocation0 [shape = 'u32[]', space=smem, size = 0x4, offset = 0x4, fixed_abs, tag = 'smem constant byte address 0x4 - core index']
  #allocation1 [shape = 'u32[72,128]{1,0:T(1,128)}', space=vmem, size = 0x9000, scoped, tag = 'internal scratch']
  %s0 = inlined_call_operand.hbm [shape: f32[2,1,512], index: 0, kind: input, shape index: {}]
  %s1 = inlined_call_operand.hbm [shape: f32[2,1,512], index: 1, kind: input, shape index: {}]
  %s2 = inlined_call_operand.hbm [shape: f32[2], index: 2, kind: output, shape index: {}]
  %s3 = sld [smem:[#allocation0]]
  $region49: #{tpu_custom_call.1} parent=0
    _
  %s5 = ssub.s32 1, %s3
  %s6 = scalar_select 0, %s5, %s3
  $region1: #{tpu_custom_call.1} parent=0
    #allocation2 [shape = 'u8[4096]{0}', space=vmem, size = 0x1000, scoped, tag = 'input window, operand 0']
    #allocation3 [shape = 's32[2]{0}', space=sflag, size = 0x8, scoped, tag = 'scoped memory for tpu_custom_call.1']
    #allocation4 [shape = 's32[2]{0}', space=sflag, size = 0x8, scoped, tag = 'scoped memory for tpu_custom_call.1']
    #allocation5 [shape = 'u8[4096]{0}', space=vmem, size = 0x1000, scoped, tag = 'input window, operand 1']
    #allocation6 [shape = 's32[2]{0}', space=sflag, size = 0x8, scoped, tag = 'scoped memory for tpu_custom_call.1']
    #allocation7 [shape = 'u8[512]{0}', space=smem, size = 0x200, scoped, tag = 'output window, operand 0, single buffered']
    %7 = vsyncpa [#allocation3], 0
    %s8 = scalar_lea.sflag [#allocation3], 1
    %9 = vsyncpa %s8, 0
    %10 = vsyncpa [#allocation6], 0
    %s11 = scalar_lea.sflag [#allocation6], 1
    %12 = vsyncpa %s11, 0
    %13 = vsyncpa [#allocation4], 0
    loop: start=0, step=1, limit=4
    $region2: #{tpu_custom_call.1} parent=1 // loop_pre_header
      _
    $region3: #{tpu_custom_call.1} parent=1 // loop_header
      %s15 = sphi 0, %s19
      %p16 = scmp.ge.s32.totalorder %s15, 4
      %s25 = sphi 0, %s27
      %s28 = sphi 0, %s25
      %s29 = sphi 0, %s28
      %s45 = sphi 0, %s29
      %s51 = sphi 0, %s53
      %s54 = sphi 0, %s51
      %s55 = sphi 0, %s54
      %s71 = sphi 0, %s55
      %s75 = sphi 0, %s75
      %s77 = sphi 0, %s75
      %s78 = sphi 0, %s77
      %s92 = sphi 0, %s78
    $region4: #{tpu_custom_call.1} parent=1 // loop_header_branch
      %18 = sbr.rel (%p16) target = $region8
    $region5: #{tpu_custom_call.1} parent=1 // loop_body
      %s20 = ssub.s32 %s15, 1
      %s21 = ssub.s32 %s15, 2
      %s22 = sadd.s32 %s15, 1
      %s23 = ssub.s32 %s15, %s22
      %p24 = scmp.eq.s32.totalorder %s23, 0
      %s26 = sadd.s32 %s25, 1
      %s27 = scalar_select %p24, %s25, %s26
      %p30 = pneg %p24
      %p31 = scmp.eq.s32.totalorder %s15, 1
      %p32 = por %p30, %p31
      %p33 = scmp.ne.s32.totalorder %s25, %s28
      %p34 = scmp.eq.s32.totalorder %s15, 0
      %p35 = por %p33, %p34
      %p36 = scmp.ne.s32.totalorder %s25, %s28
      %p37 = scmp.eq.s32.totalorder %s20, 1
      %p38 = por %p36, %p37
      %p39 = scmp.ne.s32.totalorder %s28, %s29
      %p40 = scmp.eq.s32.totalorder %s20, 0
      %p41 = por %p39, %p40
      %p42 = scmp.ne.s32.totalorder %s28, %s29
      %p43 = scmp.eq.s32.totalorder %s21, 1
      %p44 = por %p42, %p43
      %p46 = scmp.ne.s32.totalorder %s29, %s45
      %p47 = scmp.eq.s32.totalorder %s21, 0
      %p48 = por %p46, %p47
      %s49 = ssub.s32 %s15, %s22
      %p50 = scmp.eq.s32.totalorder %s49, 0
      %s52 = sadd.s32 %s51, 1
      %s53 = scalar_select %p50, %s51, %s52
      %p56 = pneg %p50
      %p57 = scmp.eq.s32.totalorder %s15, 1
      %p58 = por %p56, %p57
      %p59 = scmp.ne.s32.totalorder %s51, %s54
      %p60 = scmp.eq.s32.totalorder %s15, 0
      %p61 = por %p59, %p60
      %p62 = scmp.ne.s32.totalorder %s51, %s54
      %p63 = scmp.eq.s32.totalorder %s20, 1
      %p64 = por %p62, %p63
      %p65 = scmp.ne.s32.totalorder %s54, %s55
      %p66 = scmp.eq.s32.totalorder %s20, 0
      %p67 = por %p65, %p66
      %p68 = scmp.ne.s32.totalorder %s54, %s55
      %p69 = scmp.eq.s32.totalorder %s21, 1
      %p70 = por %p68, %p69
      %p72 = scmp.ne.s32.totalorder %s55, %s71
      %p73 = scmp.eq.s32.totalorder %s21, 0
      %p74 = por %p72, %p73
      %s76 = sadd.s32 %s75, 1
      %p79 = scmp.eq.s32.totalorder %s15, 1
      %p80 = scmp.ne.s32.totalorder %s75, %s77
      %p81 = scmp.eq.s32.totalorder %s15, 0
      %p82 = por %p80, %p81
      %p83 = scmp.ne.s32.totalorder %s75, %s77
      %p84 = scmp.eq.s32.totalorder %s20, 1
      %p85 = por %p83, %p84
      %p86 = scmp.ne.s32.totalorder %s77, %s78
      %p87 = scmp.eq.s32.totalorder %s20, 0
      %p88 = por %p86, %p87
      %p89 = scmp.ne.s32.totalorder %s77, %s78
      %p90 = scmp.eq.s32.totalorder %s21, 1
      %p91 = por %p89, %p90
      %p93 = scmp.ne.s32.totalorder %s78, %s92
      %p94 = scmp.eq.s32.totalorder %s21, 0
      %p95 = por %p93, %p94
      %p96 = scmp.le.s32.totalorder 1, %s15
      %p97 = scmp.lt.s32.totalorder %s15, 3
      %p98 = pnand %p96, %p97
      %p99 = pneg %p98
      // Predicated region
      $region9: #{tpu_custom_call.1} parent=5 // pred_check
        _
      $region10: #{tpu_custom_call.1} parent=5 // pred_check_branch
        %101 = sbr.rel (%p98) target = $region12
      $region11: #{tpu_custom_call.1} parent=5 // pred_region
        %s102 = ssub.s32 %s15, 1
      $region12: #{tpu_custom_call.1} parent=5 // pred_fallthru
        _
      %p103 = scmp.lt.s32.totalorder %s15, 2
      // Predicated region
      $region13: #{tpu_custom_call.1} parent=5 // pred_check
        %p104 = pneg %p103
      $region14: #{tpu_custom_call.1} parent=5 // pred_check_branch
        %106 = sbr.rel (%p104) target = $region16
      $region15: #{tpu_custom_call.1} parent=5 // pred_region
        // Predicated region
        $region17: #{tpu_custom_call.1} parent=15 // pred_check
          %p107 = pneg %p35
        $region18: #{tpu_custom_call.1} parent=15 // pred_check_branch
          %109 = sbr.rel (%p107) target = $region20
        $region19: #{tpu_custom_call.1} parent=15 // pred_region
          %s110 = sand.u32 %s25, 1
          %s111 = scalar_lea.sflag [#allocation3], %s110
          %s112 = sand.u32 %s25, 1
          %s113 = smul.addr %s112, 4
          %s114 = scalar_lea.vmem [#allocation2], %s113
          %116 = vsyncadd %s111, 0
          %s117 = smul.addr %s15, 4
          %s118 = scalar_lea.hbm %s0, %s117
          %s120 = sshll.u32 %s118, 4
          %s121 = int_to_ptr.hbm [resolvable:$true] %s120
          %s122 = sshll.u32 %s114, 4
          %s123 = int_to_ptr.vmem [resolvable:$true] %s122
          %125 = dma.hbm_to_vmem [thread:$0]  %s121, 64, %s123, %s111
        $region20: #{tpu_custom_call.1} parent=15 // pred_fallthru
          _
        // Predicated region
        $region21: #{tpu_custom_call.1} parent=15 // pred_check
          %p126 = pneg %p61
        $region22: #{tpu_custom_call.1} parent=15 // pred_check_branch
          %128 = sbr.rel (%p126) target = $region24
        $region23: #{tpu_custom_call.1} parent=15 // pred_region
          %s129 = sand.u32 %s51, 1
          %s130 = scalar_lea.sflag [#allocation6], %s129
          %s131 = sand.u32 %s51, 1
          %s132 = smul.addr %s131, 4
          %s133 = scalar_lea.vmem [#allocation5], %s132
          %135 = vsyncadd %s130, 0
          %s136 = smul.addr %s15, 4
          %s137 = scalar_lea.hbm %s1, %s136
          %s139 = sshll.u32 %s137, 4
          %s140 = int_to_ptr.hbm [resolvable:$true] %s139
          %s141 = sshll.u32 %s133, 4
          %s142 = int_to_ptr.vmem [resolvable:$true] %s141
          %144 = dma.hbm_to_vmem [thread:$0]  %s140, 64, %s142, %s130
        $region24: #{tpu_custom_call.1} parent=15 // pred_fallthru
          _
      $region16: #{tpu_custom_call.1} parent=5 // pred_fallthru
        _
      %p145 = scmp.le.s32.totalorder 1, %s15
      %p146 = scmp.lt.s32.totalorder %s15, 3
      %p147 = pnand %p145, %p146
      %p148 = pneg %p147
      // Predicated region
      $region25: #{tpu_custom_call.1} parent=5 // pred_check
        _
      $region26: #{tpu_custom_call.1} parent=5 // pred_check_branch
        %150 = sbr.rel (%p147) target = $region28
      $region27: #{tpu_custom_call.1} parent=5 // pred_region
        %s151 = ssub.s32 %s15, 1
        %s152 = sand.u32 %s28, 1
        %s153 = scalar_lea.sflag [#allocation3], %s152
        %s154 = sand.u32 %s28, 1
        %s155 = smul.addr %s154, 4
        %s156 = scalar_lea.vmem [#allocation2], %s155
        // Predicated region
        $region29: #{tpu_custom_call.1} parent=27 // pred_check
          %p157 = pneg %p41
        $region30: #{tpu_custom_call.1} parent=27 // pred_check_branch
          %159 = sbr.rel (%p157) target = $region32
        $region31: #{tpu_custom_call.1} parent=27 // pred_region
          %161 = dma.done %s153, 64
        $region32: #{tpu_custom_call.1} parent=27 // pred_fallthru
          _
        %s162 = sand.u32 %s54, 1
        %s163 = scalar_lea.sflag [#allocation6], %s162
        %s164 = sand.u32 %s54, 1
        %s165 = smul.addr %s164, 4
        %s166 = scalar_lea.vmem [#allocation5], %s165
        // Predicated region
        $region33: #{tpu_custom_call.1} parent=27 // pred_check
          %p167 = pneg %p67
        $region34: #{tpu_custom_call.1} parent=27 // pred_check_branch
          %169 = sbr.rel (%p167) target = $region36
        $region35: #{tpu_custom_call.1} parent=27 // pred_region
          %171 = dma.done %s163, 64
        $region36: #{tpu_custom_call.1} parent=27 // pred_fallthru
          _
        %s172 = sand.u32 %s28, 1
        %s173 = scalar_lea.sflag [#allocation3], %s172
        %s174 = sand.u32 %s28, 1
        %s175 = smul.addr %s174, 4
        %s176 = scalar_lea.vmem [#allocation2], %s175
        %p177 = pneg %p41
        %p178 = pneg %p38
        %s179 = sand.u32 %s54, 1
        %s180 = scalar_lea.sflag [#allocation6], %s179
        %s181 = sand.u32 %s54, 1
        %s182 = smul.addr %s181, 4
        %s183 = scalar_lea.vmem [#allocation5], %s182
        %p184 = pneg %p67
        %p185 = pneg %p64
        %p186 = pneg %p88
        %p187 = pneg %p85
        %v188 = vld [vmem:[%s156] sm:$0xf]
        %v189 = vld [vmem:[%s166] sm:$0xf]
        %v190 = vsub.f32 %v188, %v189
        %v191 = vmul.f32 %v190, %v190
        %v193 = vperm.slane %v191, 0
        %v194 = vperm.slane %v191, 1
        %v195 = vperm.slane %v191, 2
        %v196 = vperm.slane %v191, 3
        %vm201 = vcmask 1040384
        %v202 = vsel %vm201, %v193, 0.0
        %v203 = vsel %vm201, %v194, 0.0
        %v204 = vadd.f32 %v202, %v203
        %v205 = vsel %vm201, %v195, 0.0
        %v206 = vadd.f32 %v204, %v205
        %v207 = vsel %vm201, %v196, 0.0
        %v208 = vadd.f32 %v206, %v207
        %209 = vadd.xlane.f32.xlu0 %v208
        %v210 = vpop.xlane.xlu0 %209
        %v211 = vrot.slane %v210, 4
        %v212 = vadd.f32 %v210, %v211
        %v213 = vrot.slane %v212, 2
        %v214 = vadd.f32 %v212, %v213
        %v215 = vrot.slane %v214, 1
        %v216 = vadd.f32 %v214, %v215
        %s217 = vtos %v216
        %s218 = scalar_lea.smem [#allocation7], %s20
        %219 = sst [smem:[%s218]] %s217
        // Predicated region
        $region37: #{tpu_custom_call.1} parent=27 // pred_check
          %p220 = pneg %p85
        $region38: #{tpu_custom_call.1} parent=27 // pred_check_branch
          %222 = sbr.rel (%p220) target = $region40
        $region39: #{tpu_custom_call.1} parent=27 // pred_region
          %224 = vsyncadd [#allocation4], 0
          %s226 = sshll.u32 %s2, 4
          %s227 = int_to_ptr.hbm [resolvable:$true] %s226
          %229 = dma.smem_to_hbm [#allocation7], 16, %s227, [#allocation4]
        $region40: #{tpu_custom_call.1} parent=27 // pred_fallthru
          _
        // Predicated region
        $region41: #{tpu_custom_call.1} parent=27 // pred_check
          %p230 = pneg %p85
        $region42: #{tpu_custom_call.1} parent=27 // pred_check_branch
          %232 = sbr.rel (%p230) target = $region44
        $region43: #{tpu_custom_call.1} parent=27 // pred_region
          %234 = dma.done [#allocation4], 16
        $region44: #{tpu_custom_call.1} parent=27 // pred_fallthru
          _
        %235 = sfence
      $region28: #{tpu_custom_call.1} parent=5 // pred_fallthru
        _
      %p236 = scmp.le.s32.totalorder 2, %s15
      // Predicated region
      $region45: #{tpu_custom_call.1} parent=5 // pred_check
        %p237 = pneg %p236
      $region46: #{tpu_custom_call.1} parent=5 // pred_check_branch
        %239 = sbr.rel (%p237) target = $region48
      $region47: #{tpu_custom_call.1} parent=5 // pred_region
        %s240 = ssub.s32 %s15, 2
      $region48: #{tpu_custom_call.1} parent=5 // pred_fallthru
        _
    $region6: #{tpu_custom_call.1} parent=1 // loop_footer
      %s19 = sadd.s32 1, %s15
    $region7: #{tpu_custom_call.1} parent=1 // loop_footer_branch
      %14 = sbr.rel target = $region3
    $region8: #{tpu_custom_call.1} parent=1 // loop_exit
      _
    %241 = vsyncpa [#allocation3], 1
    %s242 = scalar_lea.sflag [#allocation3], 1
    %243 = vsyncpa %s242, 1
    %244 = vsyncpa [#allocation6], 1
    %s245 = scalar_lea.sflag [#allocation6], 1
    %246 = vsyncpa %s245, 1
    %247 = vsyncpa [#allocation4], 1
    %s248 = scalar_lea.sflag [#allocation4], 1
    %249 = vsyncpa %s248, 1

</llo_original>
